<compile_context>
chip_gen: v5e
topology: v5e:2x2
jax: 0.10.0
libtpu: 0.0.40
codegen_flags: <defaults>
</compile_context>

<pallas_src>
import math

import jax
import jax.numpy as jnp
import numpy as np
from jax.experimental import pallas as pl
from jax.experimental.pallas import tpu as pltpu

_LANE = 128
_TILE_BYTES = 1 << 20  # ~1 MiB per buffer: amortizes per-step overhead, ~85% HBM roofline


def _add_kernel(x_ref, pe_ref, out_ref):
    # Pure elementwise VPU add.  In the lane-dense path both refs are
    # (block_r, 128); in the 3-D fallback pe broadcasts over the batch axis.
    out_ref[...] = x_ref[...] + pe_ref[...]


def build_pe_table(d_model, max_len=500, dtype=jnp.float32):
    """Same construction as the PyTorch module's registered `pe` buffer."""
    position = jnp.arange(max_len, dtype=jnp.float32)[:, None]              # (L, 1)
    div_term = jnp.exp(jnp.arange(0, d_model, 2, dtype=jnp.float32)
                       * (-math.log(10000.0) / d_model))                    # (ceil(D/2),)
    ang = position * div_term                                               # (L, ceil(D/2))
    pe = jnp.zeros((max_len, d_model), dtype=jnp.float32)
    pe = pe.at[:, 0::2].set(jnp.sin(ang))
    pe = pe.at[:, 1::2].set(jnp.cos(ang)[:, : d_model // 2])
    return pe[:, None, :].astype(dtype)                                     # (L, 1, D)


def positional_encoding_forward(x, pe):
    """x: (seq_len, batch, d_model);  pe: (max_len, 1, d_model).  Eval-mode forward."""
    # TODO(synk): training-mode dropout (p=0.1) is omitted; this matches module.eval().
    S, B, D = x.shape
    pe_s = pe[:S].astype(x.dtype)                                           # (S, 1, D)
    itemsize = jnp.dtype(x.dtype).itemsize
    total = S * B * D

    if total % _LANE == 0:
        # Lane-dense path: flatten to (rows, 128) so every vld/vst is unmasked
        # and VMEM packing is dense.  The PE broadcast + reshapes are done at
        # trace time on the constant buffer / contiguous data (free).
        rows = total // _LANE
        x2d = x.reshape(rows, _LANE)
        pe2d = jnp.broadcast_to(pe_s, (S, B, D)).reshape(rows, _LANE)

        max_rows = max(8, (_TILE_BYTES // (_LANE * itemsize)) // 8 * 8)
        block_r = rows if rows <= max_rows else max_rows  # full extent OR multiple of 8
        grid = (pl.cdiv(rows, block_r),)

        out2d = pl.pallas_call(
            _add_kernel,
            out_shape=jax.ShapeDtypeStruct((rows, _LANE), x.dtype),
            grid=grid,
            in_specs=[
                pl.BlockSpec((block_r, _LANE), lambda i: (i, 0)),   # x tile
                pl.BlockSpec((block_r, _LANE), lambda i: (i, 0)),   # pe tile
            ],
            out_specs=pl.BlockSpec((block_r, _LANE), lambda i: (i, 0)),
            input_output_aliases={0: 0},   # write result in place of x
            compiler_params=pltpu.CompilerParams(
                dimension_semantics=("parallel",)),
        )(x2d, pe2d)
        return out2d.reshape(S, B, D)

    # Fallback (total not a multiple of 128): native 3-D layout with
    # full-extent (B, D) trailing dims; tile only the seq axis by byte budget.
    row_bytes = max(1, B * D * itemsize)
    block_s = max(1, min(S, _TILE_BYTES // row_bytes))
    grid = (pl.cdiv(S, block_s),)
    return pl.pallas_call(
        _add_kernel,
        out_shape=jax.ShapeDtypeStruct((S, B, D), x.dtype),
        grid=grid,
        in_specs=[
            pl.BlockSpec((block_s, B, D), lambda i: (i, 0, 0)),     # x tile
            pl.BlockSpec((block_s, 1, D), lambda i: (i, 0, 0)),     # pe tile (bcast over B)
        ],
        out_specs=pl.BlockSpec((block_s, B, D), lambda i: (i, 0, 0)),
        input_output_aliases={0: 0},
        compiler_params=pltpu.CompilerParams(
            dimension_semantics=("parallel",)),
    )(x, pe_s)


def reference_forward(x, pe):
    """Pure-JAX reference matching the PyTorch module (eval mode)."""
    return x + pe[: x.shape[0]]


if __name__ == "__main__":
    # Shapes consistent with the module: x = [seq_len, batch, d_model], d_model=32, max_len=500.
    seq_len, batch, d_model, max_len = 16, 2, 32, 500

    key = jax.random.PRNGKey(0)
    x = jax.random.normal(key, (seq_len, batch, d_model), dtype=jnp.float32)
    pe = build_pe_table(d_model, max_len=max_len)

    fwd = jax.jit(positional_encoding_forward)
    out = jax.block_until_ready(fwd(x, pe))

    ref = reference_forward(x, pe)
    np.testing.assert_allclose(np.asarray(out), np.asarray(ref), rtol=1e-6, atol=1e-6)

    print("KERNEL_OK")
</pallas_src>

<mosaic_0001>
module attributes {stable_mosaic.version = 11 : i64} {
  func.func @_add_kernel(%arg0: i32, %arg1: memref<8x128xf32, #tpu.memory_space<vmem>>, %arg2: memref<8x128xf32, #tpu.memory_space<vmem>>, %arg3: memref<8x128xf32, #tpu.memory_space<vmem>>) attributes {dimension_semantics = [#tpu.dimension_semantics<parallel>], iteration_bounds = array<i64: 1>, scalar_prefetch = 0 : i64, scratch_operands = 0 : i64, tpu.core_type = #tpu.core_type<tc>, window_params = [{transform_indices = @transform_0, window_bounds = array<i64: 8, 128>}, {transform_indices = @transform_1, window_bounds = array<i64: 8, 128>}, {transform_indices = @transform_2, window_bounds = array<i64: 8, 128>}]} {
    %c0 = arith.constant 0 : index
    %c0_0 = arith.constant 0 : index
    %0 = vector.load %arg1[%c0, %c0_0] : memref<8x128xf32, #tpu.memory_space<vmem>>, vector<8x128xf32>
    %c0_1 = arith.constant 0 : index
    %c0_2 = arith.constant 0 : index
    %1 = vector.load %arg2[%c0_1, %c0_2] : memref<8x128xf32, #tpu.memory_space<vmem>>, vector<8x128xf32>
    %2 = arith.addf %0, %1 : vector<8x128xf32>
    %c0_3 = arith.constant 0 : index
    %c0_4 = arith.constant 0 : index
    %3 = vector.load %arg3[%c0_3, %c0_4] : memref<8x128xf32, #tpu.memory_space<vmem>>, vector<8x128xf32>
    tpu.vector_store %arg3[%c0_3, %c0_4], %2 {strides = array<i32>} : memref<8x128xf32, #tpu.memory_space<vmem>>, vector<8x128xf32>,
    return
  }
  func.func @transform_0(%arg0: i32) -> (i32, i32) {
    %c0_i32 = arith.constant 0 : i32
    %c0_i32_0 = arith.constant 0 : i32
    return %arg0, %c0_i32 : i32, i32
  }
  func.func @transform_1(%arg0: i32) -> (i32, i32) {
    %c0_i32 = arith.constant 0 : i32
    %c0_i32_0 = arith.constant 0 : i32
    return %arg0, %c0_i32 : i32, i32
  }
  func.func @transform_2(%arg0: i32) -> (i32, i32) {
    %c0_i32 = arith.constant 0 : i32
    %c0_i32_0 = arith.constant 0 : i32
    return %arg0, %c0_i32 : i32, i32
  }
}

</mosaic_0001>

<llo_original>
// kernel: positional_encoding_forward.1
$region0: #{positional_encoding_forward.1}
  #allocation0 [shape = 'u32[]', space=smem, size = 0x4, offset = 0x4, fixed_abs, tag = 'smem constant byte address 0x4 - core index']
  #allocation1 [shape = 'u32[72,128]{1,0:T(1,128)}', space=vmem, size = 0x9000, scoped, tag = 'internal scratch']
  %s0 = inlined_call_operand.vmem [shape: f32[8,128], index: 0, kind: input, shape index: {}, may-alias: {0,2}]
  %s1 = inlined_call_operand.vmem [shape: f32[8,128], index: 1, kind: input, shape index: {}]
  %s2 = inlined_call_operand.vmem [shape: f32[8,128], index: 2, kind: output, shape index: {}, may-alias: {0,2}]
  %s3 = sld [smem:[#allocation0]]
  $region18: #{positional_encoding_forward.1} parent=0
    _
  %s5 = ssub.s32 1, %s3
  %s6 = scalar_select 0, %s5, %s3
  // Predicated region
  $region2: #{positional_encoding_forward.1} parent=0 // pred_check
    _
  $region3: #{positional_encoding_forward.1} parent=0 // pred_check_branch
    %8 = sbr.rel (0) target = $region5
  $region4: #{positional_encoding_forward.1} parent=0 // pred_region
    _
  $region5: #{positional_encoding_forward.1} parent=0 // pred_fallthru
    _
  // Predicated region
  $region6: #{positional_encoding_forward.1} parent=0 // pred_check
    _
  $region7: #{positional_encoding_forward.1} parent=0 // pred_check_branch
    %10 = sbr.rel (0) target = $region9
  $region8: #{positional_encoding_forward.1} parent=0 // pred_region
    _
  $region9: #{positional_encoding_forward.1} parent=0 // pred_fallthru
    _
  %v11 = vld [vmem:[%s0] sm:$0xff]
  %v12 = vld [vmem:[%s1] sm:$0xff]
  %v13 = vadd.f32 %v11, %v12
  %14 = vst [vmem:[%s2] sm:$0xff] %v13
  // Predicated region
  $region10: #{positional_encoding_forward.1} parent=0 // pred_check
    _
  $region11: #{positional_encoding_forward.1} parent=0 // pred_check_branch
    %16 = sbr.rel (0) target = $region13
  $region12: #{positional_encoding_forward.1} parent=0 // pred_region
    _
  $region13: #{positional_encoding_forward.1} parent=0 // pred_fallthru
    _
  // Predicated region
  $region14: #{positional_encoding_forward.1} parent=0 // pred_check
    _
  $region15: #{positional_encoding_forward.1} parent=0 // pred_check_branch
    %18 = sbr.rel (0) target = $region17
  $region16: #{positional_encoding_forward.1} parent=0 // pred_region
    _
  $region17: #{positional_encoding_forward.1} parent=0 // pred_fallthru
    _

</llo_original>
